<compile_context>
chip_gen: v6e
topology: v6e:2x2x1
jax: 0.10.0
libtpu: 0.0.40
codegen_flags: <defaults>
</compile_context>

<pallas_src>
import jax
import jax.numpy as jnp
from jax import lax
from jax.experimental import pallas as pl
from jax.experimental.pallas import tpu as pltpu

ONEHOT1_DIM = 3
ONEHOT2_DIM = 5
CONTINUOUS_DIM = 3
TOTAL_INPUT_DIM = ONEHOT1_DIM + ONEHOT2_DIM + CONTINUOUS_DIM  # 11
HIDDEN1 = 24
HIDDEN2 = 12
OUTPUT_SIZE = 1


def _mlp_kernel(x_ref, w1_ref, b1_ref, w2_ref, b2_ref, w3c_ref, b3_ref, o_ref):
    # x_ref: (TB, 11) block, batch on sublanes (natural HBM layout).
    x = x_ref[...]
    # layer1: Linear(11, 24) + ReLU.  Contract the minor (feature) dim of both
    # operands -> (24, TB) with batch on lanes; MXU consumes the transposed
    # operand natively (no materialized transpose).
    h1 = lax.dot_general(
        w1_ref[...], x, (((1,), (1,)), ((), ())),
        preferred_element_type=jnp.float32) + b1_ref[...]              # (24, TB)
    h1 = jnp.maximum(h1, 0.0)
    # layer2: Linear(24, 12) + ReLU -> (12, TB) on the MXU.
    h2 = jnp.dot(w2_ref[...], h1,
                 preferred_element_type=jnp.float32) + b2_ref[...]     # (12, TB)
    h2 = jnp.maximum(h2, 0.0)
    # output_layer: Linear(12, 1) as a VPU broadcast-multiply + sublane
    # reduction; result stays lane-dense (1, TB).
    out = jnp.sum(w3c_ref[...] * h2, axis=0, keepdims=True) + b3_ref[...]
    o_ref[...] = out.astype(o_ref.dtype)


def _round_up(v, m):
    return ((v + m - 1) // m) * m


def mlp_forward(x, params, *, tb_max=32768):
    """x: (B, 11) float32. params: PyTorch-oriented weights (out, in), biases (out, 1)."""
    B = x.shape[0]
    assert x.shape[1] == TOTAL_INPUT_DIM
    w1, b1 = params["w1"], params["b1"]          # (24, 11), (24, 1)
    w2, b2 = params["w2"], params["b2"]          # (12, 24), (12, 1)
    w3, b3 = params["w3"], params["b3"]          # (1, 12),  (1, 1)
    w3c = w3.T                                   # (12, 1) column for the VPU reduction

    # --- Batch tile (lane) selection ----------------------------------------
    # VMEM cost per batch element: double-buffered x tile (11 -> 128 lane pad)
    # = 2*128*4 B, double-buffered (1, TB) output (1 -> 8 sublane pad) = 2*8*4 B.
    per_lane_bytes = 2 * 128 * 4 + 2 * 8 * 4                 # 1088 B / element
    VMEM_BUDGET = 40 * 1024 * 1024                           # headroom on v7x's 64 MiB
    tb_vmem_cap = (VMEM_BUDGET // per_lane_bytes) // 128 * 128
    # Keep >= 2 grid steps when the batch allows (v7x dual-TC + pipelining).
    tb_two_tiles = _round_up(max(pl.cdiv(B, 2), 1), 128)
    TB = max(128, min(tb_max, tb_vmem_cap, tb_two_tiles))
    n_tiles = pl.cdiv(B, TB)
    B_pad = n_tiles * TB

    const = lambda a: pl.BlockSpec(a.shape, lambda i: (0, 0))

    flops = 2 * B * (TOTAL_INPUT_DIM * HIDDEN1 + HIDDEN1 * HIDDEN2
                     + HIDDEN2 * OUTPUT_SIZE)
    bytes_accessed = 4 * (
        B * (TOTAL_INPUT_DIM + OUTPUT_SIZE)
        + HIDDEN1 * TOTAL_INPUT_DIM + HIDDEN1
        + HIDDEN2 * HIDDEN1 + HIDDEN2
        + HIDDEN2 + 1)

    vmem_limit = int(min(per_lane_bytes * TB + (2 << 20), 48 << 20))

    # TODO(synk): optionally try pipeline_mode=pl.Buffered(3) on the x spec once
    # TB is tuned per-chip; skipped here to stay inside the v7x VMEM budget.
    outT = pl.pallas_call(
        _mlp_kernel,
        out_shape=jax.ShapeDtypeStruct((OUTPUT_SIZE, B_pad), jnp.float32),
        grid_spec=pltpu.PrefetchScalarGridSpec(
            num_scalar_prefetch=0,
            grid=(n_tiles,),
            in_specs=[
                # Natural (B, 11) layout: contiguous HBM reads per tile; ragged
                # last tile handled by Pallas clamping.
                pl.BlockSpec((TB, TOTAL_INPUT_DIM), lambda i: (i, 0)),
                const(w1), const(b1),
                const(w2), const(b2),
                const(w3c), const(b3),
            ],
            out_specs=pl.BlockSpec((OUTPUT_SIZE, TB), lambda i: (0, i)),
        ),
        compiler_params=pltpu.CompilerParams(
            dimension_semantics=("parallel",),
            vmem_limit_bytes=vmem_limit,
        ),
        cost_estimate=pl.CostEstimate(
            flops=flops, transcendentals=0, bytes_accessed=bytes_accessed),
    )(x, w1, b1, w2, b2, w3c, b3)

    return outT[0, :B].reshape(B, OUTPUT_SIZE)


def init_params(key):
    """Deterministic init mimicking nn.Linear default: U(-1/sqrt(fan_in), 1/sqrt(fan_in)).

    Weights in PyTorch (out, in) orientation; biases as (out, 1) columns.
    """
    ks = jax.random.split(key, 6)

    def linear(kw, kb, fan_in, fan_out):
        bound = 1.0 / jnp.sqrt(float(fan_in))
        w = jax.random.uniform(kw, (fan_out, fan_in), jnp.float32, -bound, bound)
        b = jax.random.uniform(kb, (fan_out, 1), jnp.float32, -bound, bound)
        return w, b

    w1, b1 = linear(ks[0], ks[1], TOTAL_INPUT_DIM, HIDDEN1)
    w2, b2 = linear(ks[2], ks[3], HIDDEN1, HIDDEN2)
    w3, b3 = linear(ks[4], ks[5], HIDDEN2, OUTPUT_SIZE)
    return {"w1": w1, "b1": b1, "w2": w2, "b2": b2, "w3": w3, "b3": b3}


def mlp_reference(x, params):
    h1 = jnp.maximum(x @ params["w1"].T + params["b1"].T, 0.0)
    h2 = jnp.maximum(h1 @ params["w2"].T + params["b2"].T, 0.0)
    return h2 @ params["w3"].T + params["b3"].T


if __name__ == "__main__":
    key = jax.random.PRNGKey(0)
    kp, kx = jax.random.split(key)
    params = init_params(kp)

    batch = 8
    # Input: [:, 0:3] one-hot(3), [:, 3:8] one-hot(5), [:, 8:11] continuous
    k1, k2, k3 = jax.random.split(kx, 3)
    onehot1 = jax.nn.one_hot(jax.random.randint(k1, (batch,), 0, ONEHOT1_DIM),
                             ONEHOT1_DIM, dtype=jnp.float32)
    onehot2 = jax.nn.one_hot(jax.random.randint(k2, (batch,), 0, ONEHOT2_DIM),
                             ONEHOT2_DIM, dtype=jnp.float32)
    cont = jax.random.normal(k3, (batch, CONTINUOUS_DIM), jnp.float32)
    x = jnp.concatenate([onehot1, onehot2, cont], axis=1)  # (8, 11)

    out = jax.block_until_ready(mlp_forward(x, params))
    ref = mlp_reference(x, params)
    assert out.shape == (batch, OUTPUT_SIZE)
    assert jnp.allclose(out, ref, atol=1e-5, rtol=1e-5)

    # Exercise the multi-tile + ragged-last-tile grid path (B=300 -> TB=256,
    # 2 grid steps, second tile partially out of bounds).
    big = 300
    xb = jax.random.normal(jax.random.PRNGKey(1), (big, TOTAL_INPUT_DIM), jnp.float32)
    ob = jax.block_until_ready(mlp_forward(xb, params))
    assert ob.shape == (big, OUTPUT_SIZE)
    assert jnp.allclose(ob, mlp_reference(xb, params), atol=1e-5, rtol=1e-5)

    print("KERNEL_OK")
</pallas_src>

<mosaic_0001>
module attributes {stable_mosaic.version = 11 : i64} {
  func.func @_mlp_kernel(%arg0: i32, %arg1: memref<128x11xf32, #tpu.memory_space<vmem>>, %arg2: memref<24x11xf32, #tpu.memory_space<vmem>>, %arg3: memref<24x1xf32, #tpu.memory_space<vmem>>, %arg4: memref<12x24xf32, #tpu.memory_space<vmem>>, %arg5: memref<12x1xf32, #tpu.memory_space<vmem>>, %arg6: memref<12x1xf32, #tpu.memory_space<vmem>>, %arg7: memref<1x1xf32, #tpu.memory_space<vmem>>, %arg8: memref<1x128xf32, #tpu.memory_space<vmem>>) attributes {dimension_semantics = [#tpu.dimension_semantics<parallel>], iteration_bounds = array<i64: 1>, scalar_prefetch = 0 : i64, scratch_operands = 0 : i64, tpu.core_type = #tpu.core_type<tc>, window_params = [{transform_indices = @transform_0, window_bounds = array<i64: 128, 11>}, {pipeline_mode = #tpu.pipeline_mode<synchronous>, transform_indices = @transform_1, window_bounds = array<i64: 24, 11>}, {pipeline_mode = #tpu.pipeline_mode<synchronous>, transform_indices = @transform_2, window_bounds = array<i64: 24, 1>}, {pipeline_mode = #tpu.pipeline_mode<synchronous>, transform_indices = @transform_3, window_bounds = array<i64: 12, 24>}, {pipeline_mode = #tpu.pipeline_mode<synchronous>, transform_indices = @transform_4, window_bounds = array<i64: 12, 1>}, {pipeline_mode = #tpu.pipeline_mode<synchronous>, transform_indices = @transform_5, window_bounds = array<i64: 12, 1>}, {pipeline_mode = #tpu.pipeline_mode<synchronous>, transform_indices = @transform_6, window_bounds = array<i64: 1, 1>}, {transform_indices = @transform_7, window_bounds = array<i64: 1, 128>}]} {
    %c0 = arith.constant 0 : index
    %c0_0 = arith.constant 0 : index
    %0 = vector.load %arg1[%c0, %c0_0] : memref<128x11xf32, #tpu.memory_space<vmem>>, vector<128x11xf32>
    %c0_1 = arith.constant 0 : index
    %c0_2 = arith.constant 0 : index
    %1 = vector.load %arg2[%c0_1, %c0_2] : memref<24x11xf32, #tpu.memory_space<vmem>>, vector<24x11xf32>
    %cst = arith.constant dense<0.000000e+00> : vector<24x128xf32>
    %2 = tpu.matmul %1, %0, %cst {dimension_numbers = #tpu.dot_dimension_numbers<[1], [1], [0], [0], [0, 0, 1, 0], [], []>} : vector<24x11xf32>, vector<128x11xf32>, vector<24x128xf32> -> vector<24x128xf32>
    %c0_3 = arith.constant 0 : index
    %c0_4 = arith.constant 0 : index
    %3 = vector.load %arg3[%c0_3, %c0_4] : memref<24x1xf32, #tpu.memory_space<vmem>>, vector<24x1xf32>
    %4 = vector.broadcast %3 : vector<24x1xf32> to vector<24x128xf32>
    %5 = arith.addf %2, %4 : vector<24x128xf32>
    %cst_5 = arith.constant 0.000000e+00 : f32
    %6 = vector.broadcast %cst_5 : f32 to vector<24x128xf32>
    %7 = arith.maximumf %5, %6 : vector<24x128xf32>
    %c0_6 = arith.constant 0 : index
    %c0_7 = arith.constant 0 : index
    %8 = vector.load %arg4[%c0_6, %c0_7] : memref<12x24xf32, #tpu.memory_space<vmem>>, vector<12x24xf32>
    %cst_8 = arith.constant dense<0.000000e+00> : vector<12x128xf32>
    %9 = tpu.matmul %8, %7, %cst_8 {dimension_numbers = #tpu.dot_dimension_numbers<[1], [0], [0], [1], [0, 0, 1, 1], [], []>} : vector<12x24xf32>, vector<24x128xf32>, vector<12x128xf32> -> vector<12x128xf32>
    %c0_9 = arith.constant 0 : index
    %c0_10 = arith.constant 0 : index
    %10 = vector.load %arg5[%c0_9, %c0_10] : memref<12x1xf32, #tpu.memory_space<vmem>>, vector<12x1xf32>
    %11 = vector.broadcast %10 : vector<12x1xf32> to vector<12x128xf32>
    %12 = arith.addf %9, %11 : vector<12x128xf32>
    %cst_11 = arith.constant 0.000000e+00 : f32
    %13 = vector.broadcast %cst_11 : f32 to vector<12x128xf32>
    %14 = arith.maximumf %12, %13 : vector<12x128xf32>
    %c0_12 = arith.constant 0 : index
    %c0_13 = arith.constant 0 : index
    %15 = vector.load %arg6[%c0_12, %c0_13] : memref<12x1xf32, #tpu.memory_space<vmem>>, vector<12x1xf32>
    %16 = vector.broadcast %15 : vector<12x1xf32> to vector<12x128xf32>
    %17 = arith.mulf %16, %14 : vector<12x128xf32>
    %cst_14 = arith.constant dense<0.000000e+00> : vector<128xf32>
    %18 = vector.multi_reduction <add>, %17, %cst_14 [0] : vector<12x128xf32> to vector<128xf32>
    %19 = vector.shape_cast %18 : vector<128xf32> to vector<1x128xf32>
    %c0_15 = arith.constant 0 : index
    %c0_16 = arith.constant 0 : index
    %20 = vector.load %arg7[%c0_15, %c0_16] : memref<1x1xf32, #tpu.memory_space<vmem>>, vector<1x1xf32>
    %21 = vector.broadcast %20 : vector<1x1xf32> to vector<1x128xf32>
    %22 = arith.addf %19, %21 : vector<1x128xf32>
    %c0_17 = arith.constant 0 : index
    %c0_18 = arith.constant 0 : index
    %23 = vector.load %arg8[%c0_17, %c0_18] : memref<1x128xf32, #tpu.memory_space<vmem>>, vector<1x128xf32>
    tpu.vector_store %arg8[%c0_17, %c0_18], %22 {strides = array<i32>} : memref<1x128xf32, #tpu.memory_space<vmem>>, vector<1x128xf32>,
    return
  }
  func.func @transform_0(%arg0: i32) -> (i32, i32) {
    %c0_i32 = arith.constant 0 : i32
    %c0_i32_0 = arith.constant 0 : i32
    return %arg0, %c0_i32 : i32, i32
  }
  func.func @transform_1(%arg0: i32) -> (i32, i32) {
    %c0_i32 = arith.constant 0 : i32
    %c0_i32_0 = arith.constant 0 : i32
    %c0_i32_1 = arith.constant 0 : i32
    return %c0_i32, %c0_i32_0 : i32, i32
  }
  func.func @transform_2(%arg0: i32) -> (i32, i32) {
    %c0_i32 = arith.constant 0 : i32
    %c0_i32_0 = arith.constant 0 : i32
    %c0_i32_1 = arith.constant 0 : i32
    return %c0_i32, %c0_i32_0 : i32, i32
  }
  func.func @transform_3(%arg0: i32) -> (i32, i32) {
    %c0_i32 = arith.constant 0 : i32
    %c0_i32_0 = arith.constant 0 : i32
    %c0_i32_1 = arith.constant 0 : i32
    return %c0_i32, %c0_i32_0 : i32, i32
  }
  func.func @transform_4(%arg0: i32) -> (i32, i32) {
    %c0_i32 = arith.constant 0 : i32
    %c0_i32_0 = arith.constant 0 : i32
    %c0_i32_1 = arith.constant 0 : i32
    return %c0_i32, %c0_i32_0 : i32, i32
  }
  func.func @transform_5(%arg0: i32) -> (i32, i32) {
    %c0_i32 = arith.constant 0 : i32
    %c0_i32_0 = arith.constant 0 : i32
    %c0_i32_1 = arith.constant 0 : i32
    return %c0_i32, %c0_i32_0 : i32, i32
  }
  func.func @transform_6(%arg0: i32) -> (i32, i32) {
    %c0_i32 = arith.constant 0 : i32
    %c0_i32_0 = arith.constant 0 : i32
    %c0_i32_1 = arith.constant 0 : i32
    return %c0_i32, %c0_i32_0 : i32, i32
  }
  func.func @transform_7(%arg0: i32) -> (i32, i32) {
    %c0_i32 = arith.constant 0 : i32
    %c0_i32_0 = arith.constant 0 : i32
    return %c0_i32, %arg0 : i32, i32
  }
}

</mosaic_0001>

<llo_original>
// kernel: tpu_custom_call.1
$region0: #{tpu_custom_call.1}
  #allocation0 [shape = 'u32[]', space=smem, size = 0x4, offset = 0x4, fixed_abs, tag = 'smem constant byte address 0x4 - core index']
  #allocation1 [shape = 'u32[144,128]{1,0:T(1,128)}', space=vmem, size = 0x12000, scoped, tag = 'internal scratch']
  #allocation2 [shape = 'f32[1,1]{1,0:T(1,128)S(1)}', space=vmem, size = 0x200, scoped, tag = 'scoped memory for tpu_custom_call.1']
  %s0 = inlined_call_operand.vmem [shape: f32[8,11], index: 0, kind: input, shape index: {}]
  %s1 = inlined_call_operand.vmem [shape: f32[24,11], index: 1, kind: input, shape index: {}]
  %s2 = inlined_call_operand.vmem [shape: f32[24,1], index: 2, kind: input, shape index: {}]
  %s3 = inlined_call_operand.vmem [shape: f32[12,24], index: 3, kind: input, shape index: {}]
  %s4 = inlined_call_operand.vmem [shape: f32[12,1], index: 4, kind: input, shape index: {}]
  %s5 = inlined_call_operand.vmem [shape: f32[12,1], index: 5, kind: input, shape index: {}]
  %s6 = inlined_call_operand.<no memory space> [shape: f32[1,1], index: 6, kind: input, shape index: {}]
  %s7 = inlined_call_operand.hbm [shape: f32[1,128], index: 7, kind: output, shape index: {}]
  %s8 = sld [smem:[#allocation0]]
  $region38: #{tpu_custom_call.1} parent=0
    _
  %s10 = ssub.s32 1, %s8
  %s11 = scalar_select 0, %s10, %s8
  %v12 = vstv %s6
  %13 = vst [vmem:[#allocation2] sm:$0x1] %v12
  $region1: #{tpu_custom_call.1} parent=0
    #allocation3 [shape = 'u8[512]{0}', space=vmem, size = 0x400, scoped, tag = 'output window, operand 0, single buffered']
    #allocation4 [shape = 's32[1]{0}', space=sflag, size = 0x4, scoped, tag = 'scoped memory for tpu_custom_call.1']
    %14 = vsyncpa [#allocation4], 0
    // Predicated region
    $region2: #{tpu_custom_call.1} parent=1 // pred_check
      _
    $region3: #{tpu_custom_call.1} parent=1 // pred_check_branch
      %16 = sbr.rel (0) target = $region5
    $region4: #{tpu_custom_call.1} parent=1 // pred_region
      _
    $region5: #{tpu_custom_call.1} parent=1 // pred_fallthru
      _
    // Predicated region
    $region6: #{tpu_custom_call.1} parent=1 // pred_check
      _
    $region7: #{tpu_custom_call.1} parent=1 // pred_check_branch
      %18 = sbr.rel (0) target = $region9
    $region8: #{tpu_custom_call.1} parent=1 // pred_region
      _
    $region9: #{tpu_custom_call.1} parent=1 // pred_fallthru
      _
    // Predicated region
    $region10: #{tpu_custom_call.1} parent=1 // pred_check
      _
    $region11: #{tpu_custom_call.1} parent=1 // pred_check_branch
      %20 = sbr.rel (0) target = $region13
    $region12: #{tpu_custom_call.1} parent=1 // pred_region
      _
    $region13: #{tpu_custom_call.1} parent=1 // pred_fallthru
      _
    // Predicated region
    $region14: #{tpu_custom_call.1} parent=1 // pred_check
      _
    $region15: #{tpu_custom_call.1} parent=1 // pred_check_branch
      %22 = sbr.rel (0) target = $region17
    $region16: #{tpu_custom_call.1} parent=1 // pred_region
      _
    $region17: #{tpu_custom_call.1} parent=1 // pred_fallthru
      _
    // Predicated region
    $region18: #{tpu_custom_call.1} parent=1 // pred_check
      _
    $region19: #{tpu_custom_call.1} parent=1 // pred_check_branch
      %24 = sbr.rel (0) target = $region21
    $region20: #{tpu_custom_call.1} parent=1 // pred_region
      _
    $region21: #{tpu_custom_call.1} parent=1 // pred_fallthru
      _
    // Predicated region
    $region22: #{tpu_custom_call.1} parent=1 // pred_check
      _
    $region23: #{tpu_custom_call.1} parent=1 // pred_check_branch
      %26 = sbr.rel (0) target = $region25
    $region24: #{tpu_custom_call.1} parent=1 // pred_region
      _
    $region25: #{tpu_custom_call.1} parent=1 // pred_fallthru
      _
    // Predicated region
    $region26: #{tpu_custom_call.1} parent=1 // pred_check
      _
    $region27: #{tpu_custom_call.1} parent=1 // pred_check_branch
      %28 = sbr.rel (0) target = $region29
    $region28: #{tpu_custom_call.1} parent=1 // pred_region
      _
    $region29: #{tpu_custom_call.1} parent=1 // pred_fallthru
      _
    %v29 = vld [vmem:[%s0] sm:$0xff]
    %v30 = vld [vmem:[%s0 + $0x8] sm:$0xff]
    %v31 = vld [vmem:[%s0 + $0x10] sm:$0xff]
    %v32 = vld [vmem:[%s0 + $0x18] sm:$0xff]
    %v33 = vld [vmem:[%s0 + $0x20] sm:$0xff]
    %v34 = vld [vmem:[%s0 + $0x28] sm:$0xff]
    %v35 = vld [vmem:[%s0 + $0x30] sm:$0xff]
    %v36 = vld [vmem:[%s0 + $0x38] sm:$0xff]
    %v37 = vld [vmem:[%s0 + $0x40] sm:$0xff]
    %v38 = vld [vmem:[%s0 + $0x48] sm:$0xff]
    %v39 = vld [vmem:[%s0 + $0x50] sm:$0xff]
    %v40 = vld [vmem:[%s0 + $0x58] sm:$0xff]
    %v41 = vld [vmem:[%s0 + $0x60] sm:$0xff]
    %v42 = vld [vmem:[%s0 + $0x68] sm:$0xff]
    %v43 = vld [vmem:[%s0 + $0x70] sm:$0xff]
    %v44 = vld [vmem:[%s0 + $0x78] sm:$0xff]
    %v45 = vld [vmem:[%s1] sm:$0xff]
    %v46 = vld [vmem:[%s1 + $0x8] sm:$0xff]
    %v47 = vld [vmem:[%s1 + $0x10] sm:$0xff]
    %v48 = vld [vmem:[%s2] sm:$0xff]
    %v49 = vld [vmem:[%s2 + $0x8] sm:$0xff]
    %v50 = vld [vmem:[%s2 + $0x10] sm:$0xff]
    %52 = vset.pattern.permute.xlu0 0
    %53 = vperm.xlu0 %52, %v48
    %v54 = vpop.permute.xlu0 %53
    %57 = vset.pattern.permute.xlu0 0
    %58 = vperm.xlu0 %57, %v49
    %v59 = vpop.permute.xlu0 %58
    %62 = vset.pattern.permute.xlu0 0
    %63 = vperm.xlu0 %62, %v50
    %v64 = vpop.permute.xlu0 %63
    %vm66 = vcmask 89088
    %v68 = vsel %vm66, %v45, 0
    %v71 = vsel %vm66, %v46, 0
    %v74 = vsel %vm66, %v47, 0
    %v77 = vsel %vm66, %v29, 0
    %v80 = vsel %vm66, %v30, 0
    %v83 = vsel %vm66, %v31, 0
    %v86 = vsel %vm66, %v32, 0
    %v89 = vsel %vm66, %v33, 0
    %v92 = vsel %vm66, %v34, 0
    %v95 = vsel %vm66, %v35, 0
    %v98 = vsel %vm66, %v36, 0
    %v101 = vsel %vm66, %v37, 0
    %v104 = vsel %vm66, %v38, 0
    %v107 = vsel %vm66, %v39, 0
    %v110 = vsel %vm66, %v40, 0
    %v113 = vsel %vm66, %v41, 0
    %v116 = vsel %vm66, %v42, 0
    %v119 = vsel %vm66, %v43, 0
    %v122 = vsel %vm66, %v44, 0
    %124 = vmatprep.subr.mxu0 0.0
    %125 = vmatpush1.xpose.msra.mxu0 %v122
    %126 = vmatprep.subr.mxu0 0.0
    %127 = vmatpush1.xpose.msra.mxu0 %v119
    %128 = vmatprep.subr.mxu0 0.0
    %129 = vmatpush1.xpose.msra.mxu0 %v116
    %130 = vmatprep.subr.mxu0 0.0
    %131 = vmatpush1.xpose.msra.mxu0 %v113
    %132 = vmatprep.subr.mxu0 0.0
    %133 = vmatpush1.xpose.msra.mxu0 %v110
    %134 = vmatprep.subr.mxu0 0.0
    %135 = vmatpush1.xpose.msra.mxu0 %v107
    %136 = vmatprep.subr.mxu0 0.0
    %137 = vmatpush1.xpose.msra.mxu0 %v104
    %138 = vmatprep.subr.mxu0 0.0
    %139 = vmatpush1.xpose.msra.mxu0 %v101
    %140 = vmatprep.subr.mxu0 0.0
    %141 = vmatpush1.xpose.msra.mxu0 %v98
    %142 = vmatprep.subr.mxu0 0.0
    %143 = vmatpush1.xpose.msra.mxu0 %v95
    %144 = vmatprep.subr.mxu0 0.0
    %145 = vmatpush1.xpose.msra.mxu0 %v92
    %146 = vmatprep.subr.mxu0 0.0
    %147 = vmatpush1.xpose.msra.mxu0 %v89
    %148 = vmatprep.subr.mxu0 0.0
    %149 = vmatpush1.xpose.msra.mxu0 %v86
    %150 = vmatprep.subr.mxu0 0.0
    %151 = vmatpush1.xpose.msra.mxu0 %v83
    %152 = vmatprep.subr.mxu0 0.0
    %153 = vmatpush1.xpose.msra.mxu0 %v80
    %154 = vmatprep.subr.mxu0 0.0
    %155 = vmatpush1.xpose.msra.mxu0 %v77
    %156 = vmatprep.subr.mxu0 0.0
    %157 = vmatpush2.xpose.msra.mxu0 0.0
    %158 = vmatprep.subr.mxu0 0.0
    %159 = vmatpush2.xpose.msra.mxu0 0.0
    %160 = vmatprep.subr.mxu0 0.0
    %161 = vmatpush2.xpose.msra.mxu0 0.0
    %162 = vmatprep.subr.mxu0 0.0
    %163 = vmatpush2.xpose.msra.mxu0 0.0
    %164 = vmatprep.subr.mxu0 0.0
    %165 = vmatpush2.xpose.msra.mxu0 0.0
    %166 = vmatprep.subr.mxu0 0.0
    %167 = vmatpush2.xpose.msra.mxu0 0.0
    %168 = vmatprep.subr.mxu0 0.0
    %169 = vmatpush2.xpose.msra.mxu0 0.0
    %170 = vmatprep.subr.mxu0 0.0
    %171 = vmatpush2.xpose.msra.mxu0 0.0
    %172 = vmatprep.subr.mxu0 0.0
    %173 = vmatpush2.xpose.msra.mxu0 0.0
    %174 = vmatprep.subr.mxu0 0.0
    %175 = vmatpush2.xpose.msra.mxu0 0.0
    %176 = vmatprep.subr.mxu0 0.0
    %177 = vmatpush2.xpose.msra.mxu0 0.0
    %178 = vmatprep.subr.mxu0 0.0
    %179 = vmatpush2.xpose.msra.mxu0 0.0
    %180 = vmatprep.subr.mxu0 0.0
    %181 = vmatpush2.xpose.msra.mxu0 0.0
    %182 = vmatprep.subr.mxu0 0.0
    %183 = vmatpush2.xpose.msra.mxu0 0.0
    %184 = vmatprep.subr.mxu0 0.0
    %185 = vmatpush2.xpose.msra.mxu0 0.0
    %186 = vmatprep.subr.mxu0 0.0
    %187 = vmatpush2.xpose.msra.mxu0 0.0
    %188 = vmatprep.mubr.f32.mxu0 0.0
    %189 = vmatmul.mubr.f32.gmra.mxu0 %v68
    %v190 = vpop.f32.mrf.mxu0
    %v191 = vadd.f32 %v54, %v190
    %v192 = vpop.f32.mrf.mxu0
    %193 = vmatprep.mubr.f32.mxu0 0.0
    %194 = vmatmul.mubr.f32.gmra.mxu0 %v71
    %v195 = vpop.f32.mrf.mxu0
    %v196 = vadd.f32 %v59, %v195
    %v197 = vpop.f32.mrf.mxu0
    %198 = vmatprep.mubr.f32.mxu0 0.0
    %199 = vmatmul.mubr.f32.gmra.mxu0 %v74
    %v200 = vpop.f32.mrf.mxu0
    %v201 = vadd.f32 %v64, %v200
    %v202 = vpop.f32.mrf.mxu0
    %203 = vdwg.mxu0
    %v204 = vmax.f32 %v191, 0.0
    %v205 = vmax.f32 %v196, 0.0
    %v206 = vmax.f32 %v201, 0.0
    %v207 = vld [vmem:[%s3] sm:$0xff]
    %v208 = vld [vmem:[%s3 + $0x8] sm:$0xf]
    %v209 = vld [vmem:[%s4] sm:$0xff]
    %v210 = vld [vmem:[%s4 + $0x8] sm:$0xf]
    %212 = vset.pattern.permute.xlu0 0
    %213 = vperm.xlu0 %212, %v209
    %v214 = vpop.permute.xlu0 %213
    %217 = vset.pattern.permute.xlu0 0
    %218 = vperm.xlu0 %217, %v210
    %v219 = vpop.permute.xlu0 %218
    %vm221 = vcmask 195584
    %v223 = vsel %vm221, %v207, 0
    %v226 = vsel %vm221, %v208, 0
    %228 = vmatprep.subr.mxu0 0.0
    %229 = vmatpush1.msra.mxu0 0.0
    %230 = vmatprep.subr.mxu0 0.0
    %231 = vmatpush1.msra.mxu0 0.0
    %232 = vmatprep.subr.mxu0 0.0
    %233 = vmatpush1.msra.mxu0 0.0
    %234 = vmatprep.subr.mxu0 0.0
    %235 = vmatpush1.msra.mxu0 0.0
    %236 = vmatprep.subr.mxu0 0.0
    %237 = vmatpush1.msra.mxu0 0.0
    %238 = vmatprep.subr.mxu0 0.0
    %239 = vmatpush1.msra.mxu0 0.0
    %240 = vmatprep.subr.mxu0 0.0
    %241 = vmatpush1.msra.mxu0 0.0
    %242 = vmatprep.subr.mxu0 0.0
    %243 = vmatpush1.msra.mxu0 0.0
    %244 = vmatprep.subr.mxu0 0.0
    %245 = vmatpush1.msra.mxu0 0.0
    %246 = vmatprep.subr.mxu0 0.0
    %247 = vmatpush1.msra.mxu0 0.0
    %248 = vmatprep.subr.mxu0 0.0
    %249 = vmatpush1.msra.mxu0 0.0
    %250 = vmatprep.subr.mxu0 0.0
    %251 = vmatpush1.msra.mxu0 0.0
    %252 = vmatprep.subr.mxu0 0.0
    %253 = vmatpush1.msra.mxu0 0.0
    %254 = vmatprep.subr.mxu0 0.0
    %255 = vmatpush1.msra.mxu0 %v206
    %256 = vmatprep.subr.mxu0 0.0
    %257 = vmatpush1.msra.mxu0 %v205
    %258 = vmatprep.subr.mxu0 0.0
    %259 = vmatpush1.msra.mxu0 %v204
    %260 = vmatprep.subr.mxu0 0.0
    %261 = vmatpush2.msra.mxu0 0.0
    %262 = vmatprep.subr.mxu0 0.0
    %263 = vmatpush2.msra.mxu0 0.0
    %264 = vmatprep.subr.mxu0 0.0
    %265 = vmatpush2.msra.mxu0 0.0
    %266 = vmatprep.subr.mxu0 0.0
    %267 = vmatpush2.msra.mxu0 0.0
    %268 = vmatprep.subr.mxu0 0.0
    %269 = vmatpush2.msra.mxu0 0.0
    %270 = vmatprep.subr.mxu0 0.0
    %271 = vmatpush2.msra.mxu0 0.0
    %272 = vmatprep.subr.mxu0 0.0
    %273 = vmatpush2.msra.mxu0 0.0
    %274 = vmatprep.subr.mxu0 0.0
    %275 = vmatpush2.msra.mxu0 0.0
    %276 = vmatprep.subr.mxu0 0.0
    %277 = vmatpush2.msra.mxu0 0.0
    %278 = vmatprep.subr.mxu0 0.0
    %279 = vmatpush2.msra.mxu0 0.0
    %280 = vmatprep.subr.mxu0 0.0
    %281 = vmatpush2.msra.mxu0 0.0
    %282 = vmatprep.subr.mxu0 0.0
    %283 = vmatpush2.msra.mxu0 0.0
    %284 = vmatprep.subr.mxu0 0.0
    %285 = vmatpush2.msra.mxu0 0.0
    %286 = vmatprep.subr.mxu0 0.0
    %287 = vmatpush2.msra.mxu0 0.0
    %288 = vmatprep.subr.mxu0 0.0
    %289 = vmatpush2.msra.mxu0 0.0
    %290 = vmatprep.subr.mxu0 0.0
    %291 = vmatpush2.msra.mxu0 0.0
    %292 = vmatprep.mubr.f32.mxu0 0.0
    %293 = vmatmul.mubr.f32.gmra.mxu0 %v223
    %v294 = vpop.f32.mrf.mxu0
    %v295 = vadd.f32 %v214, %v294
    %v296 = vpop.f32.mrf.mxu0
    %297 = vmatprep.mubr.f32.mxu0 0.0
    %298 = vmatmul.mubr.f32.gmra.mxu0 %v226
    %v299 = vpop.f32.mrf.mxu0
    %v300 = vadd.f32 %v219, %v299
    %v301 = vpop.f32.mrf.mxu0
    %302 = vdwg.mxu0
    %v303 = vmax.f32 %v295, 0.0
    %v304 = vmax.f32 %v300, 0.0
    %v305 = vld [vmem:[%s5] sm:$0xff]
    %v306 = vld [vmem:[%s5 + $0x8] sm:$0xf]
    %308 = vset.pattern.permute.xlu0 0
    %309 = vperm.xlu0 %308, %v305
    %v310 = vpop.permute.xlu0 %309
    %313 = vset.pattern.permute.xlu0 0
    %314 = vperm.xlu0 %313, %v306
    %v315 = vpop.permute.xlu0 %314
    %v317 = vmul.f32 %v310, %v303
    %v318 = vmul.f32 %v315, %v304
    %vm319 = vcmask 1043456
    %v320 = vsel %vm319, %v318, 0.0
    %v321 = vadd.f32 %v317, %v320
    %v322 = vrot.slane %v321, 4
    %v323 = vadd.f32 %v321, %v322
    %v324 = vrot.slane %v323, 2
    %v325 = vadd.f32 %v323, %v324
    %v326 = vrot.slane %v325, 1
    %v327 = vadd.f32 %v325, %v326
    %v328 = vld [vmem:[#allocation2] sm:$0x1]
    %330 = vset.pattern.permute.xlu0 0
    %331 = vperm.xlu0 %330, %v328
    %v332 = vpop.permute.xlu0 %331
    %v334 = vlaneseq
    %v335 = vshrl.u32 %v334, 7
    %v336 = vsub.s32 0, %v335
    %v337 = vrot.slane %v332, %v336
    %v338 = vadd.f32 %v327, %v337
    %339 = vst [vmem:[#allocation3] sm:$0x1] %v338
    // Predicated region
    $region30: #{tpu_custom_call.1} parent=1 // pred_check
      _
    $region31: #{tpu_custom_call.1} parent=1 // pred_check_branch
      %341 = sbr.rel (0) target = $region33
    $region32: #{tpu_custom_call.1} parent=1 // pred_region
      %s343 = ssub.s32 16, 16
      %344 = vsyncadd [#allocation4], %s343
      %s346 = sshll.u32 [#allocation3], 4
      %s347 = int_to_ptr.vmem [resolvable:$true] %s346
      %349 = dma.vmem_to_hbm [thread:$0]  %s347, 16, %s7, [#allocation4]
    $region33: #{tpu_custom_call.1} parent=1 // pred_fallthru
      _
    // Predicated region
    $region34: #{tpu_custom_call.1} parent=1 // pred_check
      _
    $region35: #{tpu_custom_call.1} parent=1 // pred_check_branch
      %351 = sbr.rel (0) target = $region37
    $region36: #{tpu_custom_call.1} parent=1 // pred_region
      %352 = dma.done [#allocation4], 16
    $region37: #{tpu_custom_call.1} parent=1 // pred_fallthru
      _
    %353 = vsyncpa [#allocation4], 1

</llo_original>
